<compile_context>
chip_gen: v6e
topology: v6e:2x2x1
jax: 0.10.0
libtpu: 0.0.40
codegen_flags: <defaults>
</compile_context>

<pallas_src>
import functools

import numpy as np
import jax
import jax.numpy as jnp
from jax.experimental import pallas as pl
from jax.experimental.pallas import tpu as pltpu


def _round_up(v, m):
    return ((v + m - 1) // m) * m


def _elu(x):
    # nn.ELU with alpha=1.0 (clamp the exp argument so the discarded branch
    # never overflows, even on garbage rows of a ragged last block).
    return jnp.where(x > 0, x, jnp.exp(jnp.minimum(x, 0.0)) - 1.0)


def _tarnet_kernel(x_ref, w_ref, b_ref, out_ref, *, rep_norm, input_dim,
                   h_dim, w_offs):
    cd = w_ref.dtype                  # MXU operand dtype (bf16)
    n1, n2, n3, nl = 2 * h_dim, h_dim, h_dim // 2, 2
    o_r, o_1, o_2, o_3, o_l = w_offs  # static, 8-aligned row offsets

    # Packed fused weights (bf16) — static slices of the single weight slab.
    wr = w_ref[o_r:o_r + input_dim, 0:h_dim]
    w1 = w_ref[o_1:o_1 + h_dim, 0:n1]
    w2 = w_ref[o_2:o_2 + n1, 0:n2]
    w3 = w_ref[o_3:o_3 + n2, 0:n3]
    wl = w_ref[o_l:o_l + n3, 0:nl]

    # Packed biases (f32): one row per fused layer.
    b = b_ref[...]
    br = b[0:1, 0:h_dim]
    b1 = b[1:2, 0:n1]
    b2 = b[2:3, 0:n2]
    b3 = b[3:4, 0:n3]
    bl = b[4:5, 0:nl]

    # Cast x to bf16 in-register (no wrapper-side astype pass over HBM).
    x = x_ref[...].astype(cd)

    # Shared representation layer: R_fc1 + ELU (f32 accumulation/elementwise).
    h = _elu(jnp.dot(x, wr, preferred_element_type=jnp.float32) + br)

    if rep_norm:
        sq = jnp.sum(h * h, axis=1, keepdims=True)
        rep = h * jax.lax.rsqrt(jnp.maximum(sq, 1e-10))
    else:
        rep = h

    # Fused two-head MLP (layer 1 concatenated, 2/3/logit block-diagonal).
    a = _elu(jnp.dot(rep.astype(cd), w1,
                     preferred_element_type=jnp.float32) + b1)
    a = _elu(jnp.dot(a.astype(cd), w2,
                     preferred_element_type=jnp.float32) + b2)
    a = _elu(jnp.dot(a.astype(cd), w3,
                     preferred_element_type=jnp.float32) + b3)
    logits = jnp.dot(a.astype(cd), wl,
                     preferred_element_type=jnp.float32) + bl
    probs = jax.nn.sigmoid(logits)    # (tb, 2) = [y0_prob | y1_prob]

    # Single store of the whole output block: [ rep (h_dim) | y0 | y1 ].
    out_ref[...] = jnp.concatenate([rep, probs], axis=-1).astype(out_ref.dtype)


def init_tarnet_params(key, input_dim, h_dim=32):
    """PyTorch-like Linear init; weights stored (in_features, out_features)."""
    sizes = {
        "r": (input_dim, h_dim),
        "y0_1": (h_dim, h_dim), "y0_2": (h_dim, h_dim // 2),
        "y0_3": (h_dim // 2, h_dim // 4), "y0_l": (h_dim // 4, 1),
        "y1_1": (h_dim, h_dim), "y1_2": (h_dim, h_dim // 2),
        "y1_3": (h_dim // 2, h_dim // 4), "y1_l": (h_dim // 4, 1),
    }
    params = {}
    for name, (din, dout) in sizes.items():
        key, kw, kb = jax.random.split(key, 3)
        scale = 1.0 / jnp.sqrt(jnp.float32(din))
        params["w_" + name] = jax.random.uniform(
            kw, (din, dout), jnp.float32, -scale, scale)
        params["b_" + name] = jax.random.uniform(
            kb, (1, dout), jnp.float32, -scale, scale)
    return params


def pack_tarnet_params(params, compute_dtype=jnp.bfloat16):
    """Fuse the two heads and pack all weights / biases into two slabs."""
    def blkdiag(a, c):
        m, n = a.shape
        p, q = c.shape
        out = jnp.zeros((m + p, n + q), jnp.float32)
        return out.at[:m, :n].set(a).at[m:, n:].set(c)

    wr = params["w_r"]
    w1 = jnp.concatenate([params["w_y0_1"], params["w_y1_1"]], axis=1)
    w2 = blkdiag(params["w_y0_2"], params["w_y1_2"])
    w3 = blkdiag(params["w_y0_3"], params["w_y1_3"])
    wl = blkdiag(params["w_y0_l"], params["w_y1_l"])
    mats = [wr, w1, w2, w3, wl]

    input_dim, h_dim = wr.shape

    # One bf16 weight slab; each matrix starts at a static 8-aligned row.
    offsets, off = [], 0
    for m in mats:
        offsets.append(off)
        off += _round_up(m.shape[0], 8)
    n_rows = _round_up(off, 8)
    n_cols = max(m.shape[1] for m in mats)
    w_pack = jnp.zeros((n_rows, n_cols), compute_dtype)
    for m, o in zip(mats, offsets):
        w_pack = w_pack.at[o:o + m.shape[0], :m.shape[1]].set(
            m.astype(compute_dtype))

    # One small f32 bias slab (one row per fused layer).
    biases = [
        params["b_r"],
        jnp.concatenate([params["b_y0_1"], params["b_y1_1"]], axis=1),
        jnp.concatenate([params["b_y0_2"], params["b_y1_2"]], axis=1),
        jnp.concatenate([params["b_y0_3"], params["b_y1_3"]], axis=1),
        jnp.concatenate([params["b_y0_l"], params["b_y1_l"]], axis=1),
    ]
    b_pack = jnp.zeros((8, n_cols), jnp.float32)
    for i, bv in enumerate(biases):
        b_pack = b_pack.at[i, :bv.shape[1]].set(bv[0])

    packed = dict(w_pack=w_pack, b_pack=b_pack)
    meta = dict(input_dim=int(input_dim), h_dim=int(h_dim),
                offsets=tuple(int(o) for o in offsets))
    return packed, meta


def tarnet_forward(x, packed, meta, *, rep_norm=False, tb=None):
    """Returns (y0_prob, y1_prob, B_rep_norm, None) like TARNET.forward.

    y0/y1 probabilities are returned in float32; the representation is
    returned in bfloat16 (kernel writeback is one bf16 slab).
    """
    B, input_dim = x.shape
    h_dim = meta["h_dim"]
    out_w = h_dim + 2

    if tb is None:
        tb = 4096                       # tiny per-row working set; big tiles
    if tb >= B:
        tb = B                          # single full block for small batches
        grid = (1,)
    else:
        tb = max(8, (tb // 8) * 8)      # second-minor block dim 8-aligned
        grid = (pl.cdiv(B, tb),)        # ragged last block handled by Pallas

    kernel = functools.partial(
        _tarnet_kernel, rep_norm=rep_norm, input_dim=input_dim,
        h_dim=h_dim, w_offs=meta["offsets"])

    slab = pl.pallas_call(
        kernel,
        out_shape=jax.ShapeDtypeStruct((B, out_w), jnp.bfloat16),
        grid_spec=pltpu.PrefetchScalarGridSpec(
            num_scalar_prefetch=0,
            grid=grid,
            in_specs=[
                pl.BlockSpec((tb, input_dim), lambda i: (i, 0)),
                pl.BlockSpec(packed["w_pack"].shape, lambda i: (0, 0)),
                pl.BlockSpec(packed["b_pack"].shape, lambda i: (0, 0)),
            ],
            out_specs=pl.BlockSpec((tb, out_w), lambda i: (i, 0)),
        ),
        compiler_params=pltpu.CompilerParams(
            dimension_semantics=("parallel",),
            vmem_limit_bytes=32 * 1024 * 1024),
    )(x, packed["w_pack"], packed["b_pack"])

    rep = slab[:, :h_dim]
    y0 = slab[:, h_dim:h_dim + 1].astype(jnp.float32)
    y1 = slab[:, h_dim + 1:h_dim + 2].astype(jnp.float32)
    return y0, y1, rep, None


def tarnet_reference(x, params, *, rep_norm=False, compute_dtype=jnp.bfloat16):
    """Pure-JAX reference with the same (bf16 operand / f32 accum) numerics."""
    cd = compute_dtype

    def lin(v, w, b):
        return jnp.dot(v.astype(cd), w.astype(cd),
                       preferred_element_type=jnp.float32) + b

    h = _elu(lin(x, params["w_r"], params["b_r"]))
    if rep_norm:
        sq = jnp.sum(h * h, axis=1, keepdims=True)
        rep = h * jax.lax.rsqrt(jnp.maximum(sq, 1e-10))
    else:
        rep = 1.0 * h

    def head(p):
        a = _elu(lin(rep, params[f"w_{p}_1"], params[f"b_{p}_1"]))
        a = _elu(lin(a, params[f"w_{p}_2"], params[f"b_{p}_2"]))
        a = _elu(lin(a, params[f"w_{p}_3"], params[f"b_{p}_3"]))
        return jax.nn.sigmoid(lin(a, params[f"w_{p}_l"], params[f"b_{p}_l"]))

    return head("y0"), head("y1"), rep, None


if __name__ == "__main__":
    key = jax.random.PRNGKey(0)
    k_x, k_p = jax.random.split(key)

    batch, input_dim, h_dim = 64, 16, 32
    x = jax.random.normal(k_x, (batch, input_dim), jnp.float32)
    params = init_tarnet_params(k_p, input_dim, h_dim)
    packed, meta = pack_tarnet_params(params, compute_dtype=jnp.bfloat16)

    # Kernel forward (default config: rep_norm=False, single full block).
    y0_prob, y1_prob, rep, _ = tarnet_forward(x, packed, meta, rep_norm=False)
    jax.block_until_ready((y0_prob, y1_prob, rep))

    # Numerics check against a matching-precision pure-JAX reference.
    r0, r1, rrep, _ = tarnet_reference(x, params, rep_norm=False)
    np.testing.assert_allclose(np.asarray(y0_prob), np.asarray(r0),
                               atol=2e-2, rtol=2e-2)
    np.testing.assert_allclose(np.asarray(y1_prob), np.asarray(r1),
                               atol=2e-2, rtol=2e-2)
    np.testing.assert_allclose(np.asarray(rep.astype(jnp.float32)),
                               np.asarray(rrep), atol=2e-2, rtol=2e-2)

    # Multi-block grid path (4 evenly divided tiles) + rep_norm=True branch.
    y0n, y1n, repn, _ = tarnet_forward(x, packed, meta, rep_norm=True, tb=16)
    jax.block_until_ready((y0n, y1n, repn))
    rn0, rn1, rnrep, _ = tarnet_reference(x, params, rep_norm=True)
    np.testing.assert_allclose(np.asarray(y0n), np.asarray(rn0),
                               atol=2e-2, rtol=2e-2)
    np.testing.assert_allclose(np.asarray(y1n), np.asarray(rn1),
                               atol=2e-2, rtol=2e-2)
    np.testing.assert_allclose(np.asarray(repn.astype(jnp.float32)),
                               np.asarray(rnrep), atol=2e-2, rtol=2e-2)

    # Shape / range sanity (matches PyTorch forward outputs).
    assert y0_prob.shape == (batch, 1) and y1_prob.shape == (batch, 1)
    assert rep.shape == (batch, h_dim)
    assert bool(jnp.all((y0_prob >= 0) & (y0_prob <= 1)))
    assert bool(jnp.all((y1_prob >= 0) & (y1_prob <= 1)))

    print("KERNEL_OK")
</pallas_src>

<mosaic_0001>
module attributes {stable_mosaic.version = 11 : i64} {
  func.func @_tarnet_kernel(%arg0: i32, %arg1: memref<64x16xf32, #tpu.memory_space<vmem>>, %arg2: memref<160x64xbf16, #tpu.memory_space<vmem>>, %arg3: memref<8x64xf32, #tpu.memory_space<vmem>>, %arg4: memref<64x34xbf16, #tpu.memory_space<vmem>>) attributes {dimension_semantics = [#tpu.dimension_semantics<parallel>], iteration_bounds = array<i64: 1>, scalar_prefetch = 0 : i64, scratch_operands = 0 : i64, tpu.core_type = #tpu.core_type<tc>, window_params = [{transform_indices = @transform_0, window_bounds = array<i64: 64, 16>}, {pipeline_mode = #tpu.pipeline_mode<synchronous>, transform_indices = @transform_1, window_bounds = array<i64: 160, 64>}, {pipeline_mode = #tpu.pipeline_mode<synchronous>, transform_indices = @transform_2, window_bounds = array<i64: 8, 64>}, {transform_indices = @transform_3, window_bounds = array<i64: 64, 34>}]} {
    %c0 = arith.constant 0 : index
    %c0_0 = arith.constant 0 : index
    %0 = vector.load %arg2[%c0, %c0_0] : memref<160x64xbf16, #tpu.memory_space<vmem>>, vector<16x32xbf16>
    %c16 = arith.constant 16 : index
    %c0_1 = arith.constant 0 : index
    %1 = vector.load %arg2[%c16, %c0_1] : memref<160x64xbf16, #tpu.memory_space<vmem>>, vector<32x64xbf16>
    %c48 = arith.constant 48 : index
    %c0_2 = arith.constant 0 : index
    %2 = vector.load %arg2[%c48, %c0_2] : memref<160x64xbf16, #tpu.memory_space<vmem>>, vector<64x32xbf16>
    %c112 = arith.constant 112 : index
    %c0_3 = arith.constant 0 : index
    %3 = vector.load %arg2[%c112, %c0_3] : memref<160x64xbf16, #tpu.memory_space<vmem>>, vector<32x16xbf16>
    %c144 = arith.constant 144 : index
    %c0_4 = arith.constant 0 : index
    %4 = vector.load %arg2[%c144, %c0_4] : memref<160x64xbf16, #tpu.memory_space<vmem>>, vector<16x2xbf16>
    %c0_5 = arith.constant 0 : index
    %c0_6 = arith.constant 0 : index
    %5 = vector.load %arg3[%c0_5, %c0_6] : memref<8x64xf32, #tpu.memory_space<vmem>>, vector<8x64xf32>
    %6 = vector.extract_strided_slice %5 {offsets = [0, 0], sizes = [1, 32], strides = [1, 1]} : vector<8x64xf32> to vector<1x32xf32>
    %7 = vector.extract_strided_slice %5 {offsets = [1, 0], sizes = [1, 64], strides = [1, 1]} : vector<8x64xf32> to vector<1x64xf32>
    %8 = vector.extract_strided_slice %5 {offsets = [2, 0], sizes = [1, 32], strides = [1, 1]} : vector<8x64xf32> to vector<1x32xf32>
    %9 = vector.extract_strided_slice %5 {offsets = [3, 0], sizes = [1, 16], strides = [1, 1]} : vector<8x64xf32> to vector<1x16xf32>
    %10 = vector.extract_strided_slice %5 {offsets = [4, 0], sizes = [1, 2], strides = [1, 1]} : vector<8x64xf32> to vector<1x2xf32>
    %c0_7 = arith.constant 0 : index
    %c0_8 = arith.constant 0 : index
    %11 = vector.load %arg1[%c0_7, %c0_8] : memref<64x16xf32, #tpu.memory_space<vmem>>, vector<64x16xf32>
    %12 = arith.truncf %11 : vector<64x16xf32> to vector<64x16xbf16>
    %cst = arith.constant dense<0.000000e+00> : vector<64x32xf32>
    %13 = tpu.matmul %12, %0, %cst {dimension_numbers = #tpu.dot_dimension_numbers<[1], [0], [0], [1], [0, 0, 1, 1], [], []>} : vector<64x16xbf16>, vector<16x32xbf16>, vector<64x32xf32> -> vector<64x32xf32>
    %14 = vector.broadcast %6 : vector<1x32xf32> to vector<64x32xf32>
    %15 = arith.addf %13, %14 : vector<64x32xf32>
    %cst_9 = arith.constant 0.000000e+00 : f32
    %16 = vector.broadcast %cst_9 : f32 to vector<64x32xf32>
    %17 = arith.cmpf ogt, %15, %16 : vector<64x32xf32>
    %cst_10 = arith.constant 0.000000e+00 : f32
    %18 = vector.broadcast %cst_10 : f32 to vector<64x32xf32>
    %19 = arith.minimumf %15, %18 : vector<64x32xf32>
    %20 = math.exp %19 : vector<64x32xf32>
    %cst_11 = arith.constant 1.000000e+00 : f32
    %21 = vector.broadcast %cst_11 : f32 to vector<64x32xf32>
    %22 = arith.subf %20, %21 : vector<64x32xf32>
    %23 = arith.select %17, %15, %22 : vector<64x32xi1>, vector<64x32xf32>
    %24 = arith.truncf %23 : vector<64x32xf32> to vector<64x32xbf16>
    %cst_12 = arith.constant dense<0.000000e+00> : vector<64x64xf32>
    %25 = tpu.matmul %24, %1, %cst_12 {dimension_numbers = #tpu.dot_dimension_numbers<[1], [0], [0], [1], [0, 0, 1, 1], [], []>} : vector<64x32xbf16>, vector<32x64xbf16>, vector<64x64xf32> -> vector<64x64xf32>
    %26 = vector.broadcast %7 : vector<1x64xf32> to vector<64x64xf32>
    %27 = arith.addf %25, %26 : vector<64x64xf32>
    %cst_13 = arith.constant 0.000000e+00 : f32
    %28 = vector.broadcast %cst_13 : f32 to vector<64x64xf32>
    %29 = arith.cmpf ogt, %27, %28 : vector<64x64xf32>
    %cst_14 = arith.constant 0.000000e+00 : f32
    %30 = vector.broadcast %cst_14 : f32 to vector<64x64xf32>
    %31 = arith.minimumf %27, %30 : vector<64x64xf32>
    %32 = math.exp %31 : vector<64x64xf32>
    %cst_15 = arith.constant 1.000000e+00 : f32
    %33 = vector.broadcast %cst_15 : f32 to vector<64x64xf32>
    %34 = arith.subf %32, %33 : vector<64x64xf32>
    %35 = arith.select %29, %27, %34 : vector<64x64xi1>, vector<64x64xf32>
    %36 = arith.truncf %35 : vector<64x64xf32> to vector<64x64xbf16>
    %cst_16 = arith.constant dense<0.000000e+00> : vector<64x32xf32>
    %37 = tpu.matmul %36, %2, %cst_16 {dimension_numbers = #tpu.dot_dimension_numbers<[1], [0], [0], [1], [0, 0, 1, 1], [], []>} : vector<64x64xbf16>, vector<64x32xbf16>, vector<64x32xf32> -> vector<64x32xf32>
    %38 = vector.broadcast %8 : vector<1x32xf32> to vector<64x32xf32>
    %39 = arith.addf %37, %38 : vector<64x32xf32>
    %cst_17 = arith.constant 0.000000e+00 : f32
    %40 = vector.broadcast %cst_17 : f32 to vector<64x32xf32>
    %41 = arith.cmpf ogt, %39, %40 : vector<64x32xf32>
    %cst_18 = arith.constant 0.000000e+00 : f32
    %42 = vector.broadcast %cst_18 : f32 to vector<64x32xf32>
    %43 = arith.minimumf %39, %42 : vector<64x32xf32>
    %44 = math.exp %43 : vector<64x32xf32>
    %cst_19 = arith.constant 1.000000e+00 : f32
    %45 = vector.broadcast %cst_19 : f32 to vector<64x32xf32>
    %46 = arith.subf %44, %45 : vector<64x32xf32>
    %47 = arith.select %41, %39, %46 : vector<64x32xi1>, vector<64x32xf32>
    %48 = arith.truncf %47 : vector<64x32xf32> to vector<64x32xbf16>
    %cst_20 = arith.constant dense<0.000000e+00> : vector<64x16xf32>
    %49 = tpu.matmul %48, %3, %cst_20 {dimension_numbers = #tpu.dot_dimension_numbers<[1], [0], [0], [1], [0, 0, 1, 1], [], []>} : vector<64x32xbf16>, vector<32x16xbf16>, vector<64x16xf32> -> vector<64x16xf32>
    %50 = vector.broadcast %9 : vector<1x16xf32> to vector<64x16xf32>
    %51 = arith.addf %49, %50 : vector<64x16xf32>
    %cst_21 = arith.constant 0.000000e+00 : f32
    %52 = vector.broadcast %cst_21 : f32 to vector<64x16xf32>
    %53 = arith.cmpf ogt, %51, %52 : vector<64x16xf32>
    %cst_22 = arith.constant 0.000000e+00 : f32
    %54 = vector.broadcast %cst_22 : f32 to vector<64x16xf32>
    %55 = arith.minimumf %51, %54 : vector<64x16xf32>
    %56 = math.exp %55 : vector<64x16xf32>
    %cst_23 = arith.constant 1.000000e+00 : f32
    %57 = vector.broadcast %cst_23 : f32 to vector<64x16xf32>
    %58 = arith.subf %56, %57 : vector<64x16xf32>
    %59 = arith.select %53, %51, %58 : vector<64x16xi1>, vector<64x16xf32>
    %60 = arith.truncf %59 : vector<64x16xf32> to vector<64x16xbf16>
    %cst_24 = arith.constant dense<0.000000e+00> : vector<64x2xf32>
    %61 = tpu.matmul %60, %4, %cst_24 {dimension_numbers = #tpu.dot_dimension_numbers<[1], [0], [0], [1], [0, 0, 1, 1], [], []>} : vector<64x16xbf16>, vector<16x2xbf16>, vector<64x2xf32> -> vector<64x2xf32>
    %62 = vector.broadcast %10 : vector<1x2xf32> to vector<64x2xf32>
    %63 = arith.addf %61, %62 : vector<64x2xf32>
    %64 = arith.negf %63 : vector<64x2xf32>
    %65 = math.exp %64 : vector<64x2xf32>
    %cst_25 = arith.constant 1.000000e+00 : f32
    %66 = vector.broadcast %cst_25 : f32 to vector<64x2xf32>
    %67 = arith.addf %66, %65 : vector<64x2xf32>
    %68 = arith.divf %66, %67 : vector<64x2xf32>
    %69 = tpu.concatenate %23, %68 in 1 : vector<64x32xf32>, vector<64x2xf32> -> vector<64x34xf32>
    %70 = arith.truncf %69 : vector<64x34xf32> to vector<64x34xbf16>
    %c0_26 = arith.constant 0 : index
    %c0_27 = arith.constant 0 : index
    %71 = vector.load %arg4[%c0_26, %c0_27] : memref<64x34xbf16, #tpu.memory_space<vmem>>, vector<64x34xbf16>
    tpu.vector_store %arg4[%c0_26, %c0_27], %70 {strides = array<i32>} : memref<64x34xbf16, #tpu.memory_space<vmem>>, vector<64x34xbf16>,
    return
  }
  func.func @transform_0(%arg0: i32) -> (i32, i32) {
    %c0_i32 = arith.constant 0 : i32
    %c0_i32_0 = arith.constant 0 : i32
    return %arg0, %c0_i32 : i32, i32
  }
  func.func @transform_1(%arg0: i32) -> (i32, i32) {
    %c0_i32 = arith.constant 0 : i32
    %c0_i32_0 = arith.constant 0 : i32
    %c0_i32_1 = arith.constant 0 : i32
    return %c0_i32, %c0_i32_0 : i32, i32
  }
  func.func @transform_2(%arg0: i32) -> (i32, i32) {
    %c0_i32 = arith.constant 0 : i32
    %c0_i32_0 = arith.constant 0 : i32
    %c0_i32_1 = arith.constant 0 : i32
    return %c0_i32, %c0_i32_0 : i32, i32
  }
  func.func @transform_3(%arg0: i32) -> (i32, i32) {
    %c0_i32 = arith.constant 0 : i32
    %c0_i32_0 = arith.constant 0 : i32
    return %arg0, %c0_i32 : i32, i32
  }
}

</mosaic_0001>

<llo_original>
// kernel: tpu_custom_call.1
$region0: #{tpu_custom_call.1}
  #allocation0 [shape = 'u32[]', space=smem, size = 0x4, offset = 0x4, fixed_abs, tag = 'smem constant byte address 0x4 - core index']
  #allocation1 [shape = 'u32[144,128]{1,0:T(1,128)}', space=vmem, size = 0x12000, scoped, tag = 'internal scratch']
  %s0 = inlined_call_operand.vmem [shape: f32[64,16], index: 0, kind: input, shape index: {}]
  %s1 = inlined_call_operand.vmem [shape: bf16[160,64], index: 1, kind: input, shape index: {}]
  %s2 = inlined_call_operand.vmem [shape: f32[8,64], index: 2, kind: input, shape index: {}]
  %s3 = inlined_call_operand.vmem [shape: bf16[64,34], index: 3, kind: output, shape index: {}]
  %s4 = sld [smem:[#allocation0]]
  $region22: #{tpu_custom_call.1} parent=0
    _
  %s6 = ssub.s32 1, %s4
  %s7 = scalar_select 0, %s6, %s4
  // Predicated region
  $region2: #{tpu_custom_call.1} parent=0 // pred_check
    _
  $region3: #{tpu_custom_call.1} parent=0 // pred_check_branch
    %9 = sbr.rel (0) target = $region5
  $region4: #{tpu_custom_call.1} parent=0 // pred_region
    _
  $region5: #{tpu_custom_call.1} parent=0 // pred_fallthru
    _
  // Predicated region
  $region6: #{tpu_custom_call.1} parent=0 // pred_check
    _
  $region7: #{tpu_custom_call.1} parent=0 // pred_check_branch
    %11 = sbr.rel (0) target = $region9
  $region8: #{tpu_custom_call.1} parent=0 // pred_region
    _
  $region9: #{tpu_custom_call.1} parent=0 // pred_fallthru
    _
  // Predicated region
  $region10: #{tpu_custom_call.1} parent=0 // pred_check
    _
  $region11: #{tpu_custom_call.1} parent=0 // pred_check_branch
    %13 = sbr.rel (0) target = $region13
  $region12: #{tpu_custom_call.1} parent=0 // pred_region
    _
  $region13: #{tpu_custom_call.1} parent=0 // pred_fallthru
    _
  %v15 = vld [vmem:[%s1] sm:$0xf]
  %v16 = vld [vmem:[%s1 + $0x4] sm:$0xf]
  %v17 = vld [vmem:[%s1 + $0x8] sm:$0xf]
  %v18 = vld [vmem:[%s1 + $0xc] sm:$0xf]
  %v19 = vld [vmem:[%s1 + $0x10] sm:$0xf]
  %v20 = vld [vmem:[%s1 + $0x14] sm:$0xf]
  %v21 = vld [vmem:[%s1 + $0x18] sm:$0xf]
  %v22 = vld [vmem:[%s1 + $0x1c] sm:$0xf]
  %v23 = vld [vmem:[%s1 + $0x20] sm:$0xf]
  %v24 = vld [vmem:[%s1 + $0x24] sm:$0xf]
  %v25 = vld [vmem:[%s1 + $0x28] sm:$0xf]
  %v26 = vld [vmem:[%s1 + $0x2c] sm:$0xf]
  %v27 = vld [vmem:[%s1 + $0x30] sm:$0xf]
  %v28 = vld [vmem:[%s1 + $0x34] sm:$0xf]
  %v29 = vld [vmem:[%s1 + $0x38] sm:$0xf]
  %v30 = vld [vmem:[%s1 + $0x3c] sm:$0xf]
  %v31 = vld [vmem:[%s1 + $0x40] sm:$0xf]
  %v32 = vld [vmem:[%s1 + $0x44] sm:$0xf]
  %v33 = vld [vmem:[%s1 + $0x48] sm:$0xf]
  %v34 = vld [vmem:[%s1 + $0x4c] sm:$0xf]
  %v35 = vld [vmem:[%s2] sm:$0xff]
  %v36 = vld [vmem:[%s0] sm:$0xff]
  %v37 = vld [vmem:[%s0 + $0x8] sm:$0xff]
  %v38 = vld [vmem:[%s0 + $0x10] sm:$0xff]
  %v39 = vld [vmem:[%s0 + $0x18] sm:$0xff]
  %v40 = vld [vmem:[%s0 + $0x20] sm:$0xff]
  %v41 = vld [vmem:[%s0 + $0x28] sm:$0xff]
  %v42 = vld [vmem:[%s0 + $0x30] sm:$0xff]
  %v43 = vld [vmem:[%s0 + $0x38] sm:$0xff]
  %v44 = vpack.c.bf16 %v37, %v36
  %v45 = vpack.c.bf16 %v39, %v38
  %v46 = vpack.c.bf16 %v41, %v40
  %v47 = vpack.c.bf16 %v43, %v42
  %v48 = vlaneseq
  %v49 = vshrl.u32 %v48, 7
  %v50 = vsub.s32 0, %v49
  %v51 = vrot.slane %v35, %v50
  %v54 = vunpack.c.l.b16 %v15
  %v55 = vunpack.c.l.b16 %v16
  %v56 = vpack.c.b16 %v55, %v54
  %vm58 = vcmask 130048
  %v60 = vsel %vm58, %v44, 0
  %v63 = vsel %vm58, %v45, 0
  %v66 = vsel %vm58, %v46, 0
  %v69 = vsel %vm58, %v47, 0
  %71 = vmatprep.subr.bf16.mxu0 0
  %72 = vmatpush1.bf16.msra.mxu0 0
  %73 = vmatprep.subr.bf16.mxu0 0
  %74 = vmatpush1.bf16.msra.mxu0 0
  %75 = vmatprep.subr.bf16.mxu0 0
  %76 = vmatpush1.bf16.msra.mxu0 0
  %77 = vmatprep.subr.bf16.mxu0 0
  %78 = vmatpush1.bf16.msra.mxu0 0
  %79 = vmatprep.subr.bf16.mxu0 0
  %80 = vmatpush1.bf16.msra.mxu0 0
  %81 = vmatprep.subr.bf16.mxu0 0
  %82 = vmatpush1.bf16.msra.mxu0 0
  %83 = vmatprep.subr.bf16.mxu0 0
  %84 = vmatpush1.bf16.msra.mxu0 0
  %85 = vmatprep.subr.bf16.mxu0 0
  %86 = vmatpush1.bf16.msra.mxu0 %v56
  %87 = vmatprep.subr.bf16.mxu0 0
  %88 = vmatpush2.bf16.msra.mxu0 0
  %89 = vmatprep.subr.bf16.mxu0 0
  %90 = vmatpush2.bf16.msra.mxu0 0
  %91 = vmatprep.subr.bf16.mxu0 0
  %92 = vmatpush2.bf16.msra.mxu0 0
  %93 = vmatprep.subr.bf16.mxu0 0
  %94 = vmatpush2.bf16.msra.mxu0 0
  %95 = vmatprep.subr.bf16.mxu0 0
  %96 = vmatpush2.bf16.msra.mxu0 0
  %97 = vmatprep.subr.bf16.mxu0 0
  %98 = vmatpush2.bf16.msra.mxu0 0
  %99 = vmatprep.subr.bf16.mxu0 0
  %100 = vmatpush2.bf16.msra.mxu0 0
  %101 = vmatprep.subr.bf16.mxu0 0
  %102 = vmatpush2.bf16.msra.mxu0 0
  %103 = vmatprep.mubr.bf16.mxu0 0
  %104 = vmatmul.mubr.bf16.gmra.mxu0 %v60
  %v105 = vpop.f32.mrf.mxu0
  %v106 = vadd.f32 %v51, %v105
  %v107 = vpop.f32.mrf.mxu0
  %v108 = vpop.f32.mrf.mxu0
  %v109 = vadd.f32 %v51, %v108
  %v110 = vpop.f32.mrf.mxu0
  %111 = vmatprep.mubr.bf16.mxu0 0
  %112 = vmatmul.mubr.bf16.gmra.mxu0 %v63
  %v113 = vpop.f32.mrf.mxu0
  %v114 = vadd.f32 %v51, %v113
  %v115 = vpop.f32.mrf.mxu0
  %v116 = vpop.f32.mrf.mxu0
  %v117 = vadd.f32 %v51, %v116
  %v118 = vpop.f32.mrf.mxu0
  %119 = vmatprep.mubr.bf16.mxu0 0
  %120 = vmatmul.mubr.bf16.gmra.mxu0 %v66
  %v121 = vpop.f32.mrf.mxu0
  %v122 = vadd.f32 %v51, %v121
  %v123 = vpop.f32.mrf.mxu0
  %v124 = vpop.f32.mrf.mxu0
  %v125 = vadd.f32 %v51, %v124
  %v126 = vpop.f32.mrf.mxu0
  %127 = vmatprep.mubr.bf16.mxu0 0
  %128 = vmatmul.mubr.bf16.gmra.mxu0 %v69
  %v129 = vpop.f32.mrf.mxu0
  %v130 = vadd.f32 %v51, %v129
  %v131 = vpop.f32.mrf.mxu0
  %v132 = vpop.f32.mrf.mxu0
  %v133 = vadd.f32 %v51, %v132
  %v134 = vpop.f32.mrf.mxu0
  %135 = vdwg.mxu0
  %vm136 = vcmp.gt.f32.partialorder %v106, 0.0
  %vm137 = vcmp.gt.f32.partialorder %v109, 0.0
  %vm138 = vcmp.gt.f32.partialorder %v114, 0.0
  %vm139 = vcmp.gt.f32.partialorder %v117, 0.0
  %vm140 = vcmp.gt.f32.partialorder %v122, 0.0
  %vm141 = vcmp.gt.f32.partialorder %v125, 0.0
  %vm142 = vcmp.gt.f32.partialorder %v130, 0.0
  %vm143 = vcmp.gt.f32.partialorder %v133, 0.0
  %v144 = vmin.f32 %v106, 0.0
  %v145 = vmin.f32 %v109, 0.0
  %v146 = vmin.f32 %v114, 0.0
  %v147 = vmin.f32 %v117, 0.0
  %v148 = vmin.f32 %v122, 0.0
  %v149 = vmin.f32 %v125, 0.0
  %v150 = vmin.f32 %v130, 0.0
  %v151 = vmin.f32 %v133, 0.0
  %v152 = vmul.f32 %v144, 1.442695
  %v153 = vpow.pop %v152
  %v154 = vmul.f32 %v145, 1.442695
  %v155 = vpow.pop %v154
  %v156 = vmul.f32 %v146, 1.442695
  %v157 = vpow.pop %v156
  %v158 = vmul.f32 %v147, 1.442695
  %v159 = vpow.pop %v158
  %v160 = vmul.f32 %v148, 1.442695
  %v161 = vpow.pop %v160
  %v162 = vmul.f32 %v149, 1.442695
  %v163 = vpow.pop %v162
  %v164 = vmul.f32 %v150, 1.442695
  %v165 = vpow.pop %v164
  %v166 = vmul.f32 %v151, 1.442695
  %v167 = vpow.pop %v166
  %v168 = vsub.f32 %v153, 1.0
  %v169 = vsub.f32 %v155, 1.0
  %v170 = vsub.f32 %v157, 1.0
  %v171 = vsub.f32 %v159, 1.0
  %v172 = vsub.f32 %v161, 1.0
  %v173 = vsub.f32 %v163, 1.0
  %v174 = vsub.f32 %v165, 1.0
  %v175 = vsub.f32 %v167, 1.0
  %v176 = vsel %vm136, %v106, %v168
  %v177 = vsel %vm137, %v109, %v169
  %v178 = vsel %vm138, %v114, %v170
  %v179 = vsel %vm139, %v117, %v171
  %v180 = vsel %vm140, %v122, %v172
  %v181 = vsel %vm141, %v125, %v173
  %v182 = vsel %vm142, %v130, %v174
  %v183 = vsel %vm143, %v133, %v175
  %v184 = vpack.c.bf16 %v177, %v176
  %v185 = vpack.c.bf16 %v179, %v178
  %v186 = vpack.c.bf16 %v181, %v180
  %v187 = vpack.c.bf16 %v183, %v182
  %v188 = vlaneseq
  %v189 = vshrl.u32 %v188, 7
  %v190 = vsub.s32 1, %v189
  %v191 = vrot.slane %v35, %v190
  %v196 = vunpack.c.l.b16 %v17
  %v197 = vunpack.c.l.b16 %v18
  %v198 = vunpack.c.l.b16 %v19
  %v199 = vunpack.c.l.b16 %v20
  %v200 = vpack.c.b16 %v197, %v196
  %v201 = vpack.c.b16 %v199, %v198
  %vm204 = vcmask 261120
  %v206 = vsel %vm204, %v184, 0
  %v209 = vsel %vm204, %v185, 0
  %v212 = vsel %vm204, %v186, 0
  %v215 = vsel %vm204, %v187, 0
  %217 = vmatprep.subr.bf16.mxu0 0
  %218 = vmatpush1.bf16.msra.mxu0 0
  %219 = vmatprep.subr.bf16.mxu0 0
  %220 = vmatpush1.bf16.msra.mxu0 0
  %221 = vmatprep.subr.bf16.mxu0 0
  %222 = vmatpush1.bf16.msra.mxu0 0
  %223 = vmatprep.subr.bf16.mxu0 0
  %224 = vmatpush1.bf16.msra.mxu0 0
  %225 = vmatprep.subr.bf16.mxu0 0
  %226 = vmatpush1.bf16.msra.mxu0 0
  %227 = vmatprep.subr.bf16.mxu0 0
  %228 = vmatpush1.bf16.msra.mxu0 0
  %229 = vmatprep.subr.bf16.mxu0 0
  %230 = vmatpush1.bf16.msra.mxu0 %v201
  %231 = vmatprep.subr.bf16.mxu0 0
  %232 = vmatpush1.bf16.msra.mxu0 %v200
  %233 = vmatprep.subr.bf16.mxu0 0
  %234 = vmatpush2.bf16.msra.mxu0 0
  %235 = vmatprep.subr.bf16.mxu0 0
  %236 = vmatpush2.bf16.msra.mxu0 0
  %237 = vmatprep.subr.bf16.mxu0 0
  %238 = vmatpush2.bf16.msra.mxu0 0
  %239 = vmatprep.subr.bf16.mxu0 0
  %240 = vmatpush2.bf16.msra.mxu0 0
  %241 = vmatprep.subr.bf16.mxu0 0
  %242 = vmatpush2.bf16.msra.mxu0 0
  %243 = vmatprep.subr.bf16.mxu0 0
  %244 = vmatpush2.bf16.msra.mxu0 0
  %245 = vmatprep.subr.bf16.mxu0 0
  %246 = vmatpush2.bf16.msra.mxu0 0
  %247 = vmatprep.subr.bf16.mxu0 0
  %248 = vmatpush2.bf16.msra.mxu0 0
  %249 = vmatprep.mubr.bf16.mxu0 0
  %250 = vmatmul.mubr.bf16.gmra.mxu0 %v206
  %v251 = vpop.f32.mrf.mxu0
  %v252 = vadd.f32 %v191, %v251
  %v253 = vpop.f32.mrf.mxu0
  %v254 = vpop.f32.mrf.mxu0
  %v255 = vadd.f32 %v191, %v254
  %v256 = vpop.f32.mrf.mxu0
  %257 = vmatprep.mubr.bf16.mxu0 0
  %258 = vmatmul.mubr.bf16.gmra.mxu0 %v209
  %v259 = vpop.f32.mrf.mxu0
  %v260 = vadd.f32 %v191, %v259
  %v261 = vpop.f32.mrf.mxu0
  %v262 = vpop.f32.mrf.mxu0
  %v263 = vadd.f32 %v191, %v262
  %v264 = vpop.f32.mrf.mxu0
  %265 = vmatprep.mubr.bf16.mxu0 0
  %266 = vmatmul.mubr.bf16.gmra.mxu0 %v212
  %v267 = vpop.f32.mrf.mxu0
  %v268 = vadd.f32 %v191, %v267
  %v269 = vpop.f32.mrf.mxu0
  %v270 = vpop.f32.mrf.mxu0
  %v271 = vadd.f32 %v191, %v270
  %v272 = vpop.f32.mrf.mxu0
  %273 = vmatprep.mubr.bf16.mxu0 0
  %274 = vmatmul.mubr.bf16.gmra.mxu0 %v215
  %v275 = vpop.f32.mrf.mxu0
  %v276 = vadd.f32 %v191, %v275
  %v277 = vpop.f32.mrf.mxu0
  %v278 = vpop.f32.mrf.mxu0
  %v279 = vadd.f32 %v191, %v278
  %v280 = vpop.f32.mrf.mxu0
  %281 = vdwg.mxu0
  %vm282 = vcmp.gt.f32.partialorder %v252, 0.0
  %vm283 = vcmp.gt.f32.partialorder %v255, 0.0
  %vm284 = vcmp.gt.f32.partialorder %v260, 0.0
  %vm285 = vcmp.gt.f32.partialorder %v263, 0.0
  %vm286 = vcmp.gt.f32.partialorder %v268, 0.0
  %vm287 = vcmp.gt.f32.partialorder %v271, 0.0
  %vm288 = vcmp.gt.f32.partialorder %v276, 0.0
  %vm289 = vcmp.gt.f32.partialorder %v279, 0.0
  %v290 = vmin.f32 %v252, 0.0
  %v291 = vmin.f32 %v255, 0.0
  %v292 = vmin.f32 %v260, 0.0
  %v293 = vmin.f32 %v263, 0.0
  %v294 = vmin.f32 %v268, 0.0
  %v295 = vmin.f32 %v271, 0.0
  %v296 = vmin.f32 %v276, 0.0
  %v297 = vmin.f32 %v279, 0.0
  %v298 = vmul.f32 %v290, 1.442695
  %v299 = vpow.pop %v298
  %v300 = vmul.f32 %v291, 1.442695
  %v301 = vpow.pop %v300
  %v302 = vmul.f32 %v292, 1.442695
  %v303 = vpow.pop %v302
  %v304 = vmul.f32 %v293, 1.442695
  %v305 = vpow.pop %v304
  %v306 = vmul.f32 %v294, 1.442695
  %v307 = vpow.pop %v306
  %v308 = vmul.f32 %v295, 1.442695
  %v309 = vpow.pop %v308
  %v310 = vmul.f32 %v296, 1.442695
  %v311 = vpow.pop %v310
  %v312 = vmul.f32 %v297, 1.442695
  %v313 = vpow.pop %v312
  %v314 = vsub.f32 %v299, 1.0
  %v315 = vsub.f32 %v301, 1.0
  %v316 = vsub.f32 %v303, 1.0
  %v317 = vsub.f32 %v305, 1.0
  %v318 = vsub.f32 %v307, 1.0
  %v319 = vsub.f32 %v309, 1.0
  %v320 = vsub.f32 %v311, 1.0
  %v321 = vsub.f32 %v313, 1.0
  %v322 = vsel %vm282, %v252, %v314
  %v323 = vsel %vm283, %v255, %v315
  %v324 = vsel %vm284, %v260, %v316
  %v325 = vsel %vm285, %v263, %v317
  %v326 = vsel %vm286, %v268, %v318
  %v327 = vsel %vm287, %v271, %v319
  %v328 = vsel %vm288, %v276, %v320
  %v329 = vsel %vm289, %v279, %v321
  %v330 = vpack.c.bf16 %v323, %v322
  %v331 = vpack.c.bf16 %v325, %v324
  %v332 = vpack.c.bf16 %v327, %v326
  %v333 = vpack.c.bf16 %v329, %v328
  %v334 = vlaneseq
  %v335 = vshrl.u32 %v334, 7
  %v336 = vsub.s32 2, %v335
  %v337 = vrot.slane %v35, %v336
  %v346 = vunpack.c.l.b16 %v21
  %v347 = vunpack.c.l.b16 %v22
  %v348 = vunpack.c.l.b16 %v23
  %v349 = vunpack.c.l.b16 %v24
  %v350 = vunpack.c.l.b16 %v25
  %v351 = vunpack.c.l.b16 %v26
  %v352 = vunpack.c.l.b16 %v27
  %v353 = vunpack.c.l.b16 %v28
  %v354 = vpack.c.b16 %v347, %v346
  %v355 = vpack.c.b16 %v349, %v348
  %v356 = vpack.c.b16 %v351, %v350
  %v357 = vpack.c.b16 %v353, %v352
  %vm362 = vcmask 523264
  %v364 = vsel %vm362, %v330, 0
  %v367 = vsel %vm362, %v331, 0
  %v370 = vsel %vm362, %v332, 0
  %v373 = vsel %vm362, %v333, 0
  %375 = vmatprep.subr.bf16.mxu0 0
  %376 = vmatpush1.bf16.msra.mxu0 0
  %377 = vmatprep.subr.bf16.mxu0 0
  %378 = vmatpush1.bf16.msra.mxu0 0
  %379 = vmatprep.subr.bf16.mxu0 0
  %380 = vmatpush1.bf16.msra.mxu0 0
  %381 = vmatprep.subr.bf16.mxu0 0
  %382 = vmatpush1.bf16.msra.mxu0 0
  %383 = vmatprep.subr.bf16.mxu0 0
  %384 = vmatpush1.bf16.msra.mxu0 %v357
  %385 = vmatprep.subr.bf16.mxu0 0
  %386 = vmatpush1.bf16.msra.mxu0 %v356
  %387 = vmatprep.subr.bf16.mxu0 0
  %388 = vmatpush1.bf16.msra.mxu0 %v355
  %389 = vmatprep.subr.bf16.mxu0 0
  %390 = vmatpush1.bf16.msra.mxu0 %v354
  %391 = vmatprep.subr.bf16.mxu0 0
  %392 = vmatpush2.bf16.msra.mxu0 0
  %393 = vmatprep.subr.bf16.mxu0 0
  %394 = vmatpush2.bf16.msra.mxu0 0
  %395 = vmatprep.subr.bf16.mxu0 0
  %396 = vmatpush2.bf16.msra.mxu0 0
  %397 = vmatprep.subr.bf16.mxu0 0
  %398 = vmatpush2.bf16.msra.mxu0 0
  %399 = vmatprep.subr.bf16.mxu0 0
  %400 = vmatpush2.bf16.msra.mxu0 0
  %401 = vmatprep.subr.bf16.mxu0 0
  %402 = vmatpush2.bf16.msra.mxu0 0
  %403 = vmatprep.subr.bf16.mxu0 0
  %404 = vmatpush2.bf16.msra.mxu0 0
  %405 = vmatprep.subr.bf16.mxu0 0
  %406 = vmatpush2.bf16.msra.mxu0 0
  %407 = vmatprep.mubr.bf16.mxu0 0
  %408 = vmatmul.mubr.bf16.gmra.mxu0 %v364
  %v409 = vpop.f32.mrf.mxu0
  %v410 = vadd.f32 %v337, %v409
  %v411 = vpop.f32.mrf.mxu0
  %v412 = vpop.f32.mrf.mxu0
  %v413 = vadd.f32 %v337, %v412
  %v414 = vpop.f32.mrf.mxu0
  %415 = vmatprep.mubr.bf16.mxu0 0
  %416 = vmatmul.mubr.bf16.gmra.mxu0 %v367
  %v417 = vpop.f32.mrf.mxu0
  %v418 = vadd.f32 %v337, %v417
  %v419 = vpop.f32.mrf.mxu0
  %v420 = vpop.f32.mrf.mxu0
  %v421 = vadd.f32 %v337, %v420
  %v422 = vpop.f32.mrf.mxu0
  %423 = vmatprep.mubr.bf16.mxu0 0
  %424 = vmatmul.mubr.bf16.gmra.mxu0 %v370
  %v425 = vpop.f32.mrf.mxu0
  %v426 = vadd.f32 %v337, %v425
  %v427 = vpop.f32.mrf.mxu0
  %v428 = vpop.f32.mrf.mxu0
  %v429 = vadd.f32 %v337, %v428
  %v430 = vpop.f32.mrf.mxu0
  %431 = vmatprep.mubr.bf16.mxu0 0
  %432 = vmatmul.mubr.bf16.gmra.mxu0 %v373
  %v433 = vpop.f32.mrf.mxu0
  %v434 = vadd.f32 %v337, %v433
  %v435 = vpop.f32.mrf.mxu0
  %v436 = vpop.f32.mrf.mxu0
  %v437 = vadd.f32 %v337, %v436
  %v438 = vpop.f32.mrf.mxu0
  %439 = vdwg.mxu0
  %vm440 = vcmp.gt.f32.partialorder %v410, 0.0
  %vm441 = vcmp.gt.f32.partialorder %v413, 0.0
  %vm442 = vcmp.gt.f32.partialorder %v418, 0.0
  %vm443 = vcmp.gt.f32.partialorder %v421, 0.0
  %vm444 = vcmp.gt.f32.partialorder %v426, 0.0
  %vm445 = vcmp.gt.f32.partialorder %v429, 0.0
  %vm446 = vcmp.gt.f32.partialorder %v434, 0.0
  %vm447 = vcmp.gt.f32.partialorder %v437, 0.0
  %v448 = vmin.f32 %v410, 0.0
  %v449 = vmin.f32 %v413, 0.0
  %v450 = vmin.f32 %v418, 0.0
  %v451 = vmin.f32 %v421, 0.0
  %v452 = vmin.f32 %v426, 0.0
  %v453 = vmin.f32 %v429, 0.0
  %v454 = vmin.f32 %v434, 0.0
  %v455 = vmin.f32 %v437, 0.0
  %v456 = vmul.f32 %v448, 1.442695
  %v457 = vpow.pop %v456
  %v458 = vmul.f32 %v449, 1.442695
  %v459 = vpow.pop %v458
  %v460 = vmul.f32 %v450, 1.442695
  %v461 = vpow.pop %v460
  %v462 = vmul.f32 %v451, 1.442695
  %v463 = vpow.pop %v462
  %v464 = vmul.f32 %v452, 1.442695
  %v465 = vpow.pop %v464
  %v466 = vmul.f32 %v453, 1.442695
  %v467 = vpow.pop %v466
  %v468 = vmul.f32 %v454, 1.442695
  %v469 = vpow.pop %v468
  %v470 = vmul.f32 %v455, 1.442695
  %v471 = vpow.pop %v470
  %v472 = vsub.f32 %v457, 1.0
  %v473 = vsub.f32 %v459, 1.0
  %v474 = vsub.f32 %v461, 1.0
  %v475 = vsub.f32 %v463, 1.0
  %v476 = vsub.f32 %v465, 1.0
  %v477 = vsub.f32 %v467, 1.0
  %v478 = vsub.f32 %v469, 1.0
  %v479 = vsub.f32 %v471, 1.0
  %v480 = vsel %vm440, %v410, %v472
  %v481 = vsel %vm441, %v413, %v473
  %v482 = vsel %vm442, %v418, %v474
  %v483 = vsel %vm443, %v421, %v475
  %v484 = vsel %vm444, %v426, %v476
  %v485 = vsel %vm445, %v429, %v477
  %v486 = vsel %vm446, %v434, %v478
  %v487 = vsel %vm447, %v437, %v479
  %v488 = vpack.c.bf16 %v481, %v480
  %v489 = vpack.c.bf16 %v483, %v482
  %v490 = vpack.c.bf16 %v485, %v484
  %v491 = vpack.c.bf16 %v487, %v486
  %v492 = vlaneseq
  %v493 = vshrl.u32 %v492, 7
  %v494 = vsub.s32 3, %v493
  %v495 = vrot.slane %v35, %v494
  %v500 = vunpack.c.l.b16 %v29
  %v501 = vunpack.c.l.b16 %v30
  %v502 = vunpack.c.l.b16 %v31
  %v503 = vunpack.c.l.b16 %v32
  %v504 = vpack.c.b16 %v501, %v500
  %v505 = vpack.c.b16 %v503, %v502
  %v509 = vsel %vm204, %v488, 0
  %v512 = vsel %vm204, %v489, 0
  %v515 = vsel %vm204, %v490, 0
  %v518 = vsel %vm204, %v491, 0
  %520 = vmatprep.subr.bf16.mxu0 0
  %521 = vmatpush1.bf16.msra.mxu0 0
  %522 = vmatprep.subr.bf16.mxu0 0
  %523 = vmatpush1.bf16.msra.mxu0 0
  %524 = vmatprep.subr.bf16.mxu0 0
  %525 = vmatpush1.bf16.msra.mxu0 0
  %526 = vmatprep.subr.bf16.mxu0 0
  %527 = vmatpush1.bf16.msra.mxu0 0
  %528 = vmatprep.subr.bf16.mxu0 0
  %529 = vmatpush1.bf16.msra.mxu0 0
  %530 = vmatprep.subr.bf16.mxu0 0
  %531 = vmatpush1.bf16.msra.mxu0 0
  %532 = vmatprep.subr.bf16.mxu0 0
  %533 = vmatpush1.bf16.msra.mxu0 %v505
  %534 = vmatprep.subr.bf16.mxu0 0
  %535 = vmatpush1.bf16.msra.mxu0 %v504
  %536 = vmatprep.subr.bf16.mxu0 0
  %537 = vmatpush2.bf16.msra.mxu0 0
  %538 = vmatprep.subr.bf16.mxu0 0
  %539 = vmatpush2.bf16.msra.mxu0 0
  %540 = vmatprep.subr.bf16.mxu0 0
  %541 = vmatpush2.bf16.msra.mxu0 0
  %542 = vmatprep.subr.bf16.mxu0 0
  %543 = vmatpush2.bf16.msra.mxu0 0
  %544 = vmatprep.subr.bf16.mxu0 0
  %545 = vmatpush2.bf16.msra.mxu0 0
  %546 = vmatprep.subr.bf16.mxu0 0
  %547 = vmatpush2.bf16.msra.mxu0 0
  %548 = vmatprep.subr.bf16.mxu0 0
  %549 = vmatpush2.bf16.msra.mxu0 0
  %550 = vmatprep.subr.bf16.mxu0 0
  %551 = vmatpush2.bf16.msra.mxu0 0
  %552 = vmatprep.mubr.bf16.mxu0 0
  %553 = vmatmul.mubr.bf16.gmra.mxu0 %v509
  %v554 = vpop.f32.mrf.mxu0
  %v555 = vadd.f32 %v495, %v554
  %v556 = vpop.f32.mrf.mxu0
  %v557 = vpop.f32.mrf.mxu0
  %v558 = vadd.f32 %v495, %v557
  %v559 = vpop.f32.mrf.mxu0
  %560 = vmatprep.mubr.bf16.mxu0 0
  %561 = vmatmul.mubr.bf16.gmra.mxu0 %v512
  %v562 = vpop.f32.mrf.mxu0
  %v563 = vadd.f32 %v495, %v562
  %v564 = vpop.f32.mrf.mxu0
  %v565 = vpop.f32.mrf.mxu0
  %v566 = vadd.f32 %v495, %v565
  %v567 = vpop.f32.mrf.mxu0
  %568 = vmatprep.mubr.bf16.mxu0 0
  %569 = vmatmul.mubr.bf16.gmra.mxu0 %v515
  %v570 = vpop.f32.mrf.mxu0
  %v571 = vadd.f32 %v495, %v570
  %v572 = vpop.f32.mrf.mxu0
  %v573 = vpop.f32.mrf.mxu0
  %v574 = vadd.f32 %v495, %v573
  %v575 = vpop.f32.mrf.mxu0
  %576 = vmatprep.mubr.bf16.mxu0 0
  %577 = vmatmul.mubr.bf16.gmra.mxu0 %v518
  %v578 = vpop.f32.mrf.mxu0
  %v579 = vadd.f32 %v495, %v578
  %v580 = vpop.f32.mrf.mxu0
  %v581 = vpop.f32.mrf.mxu0
  %v582 = vadd.f32 %v495, %v581
  %v583 = vpop.f32.mrf.mxu0
  %584 = vdwg.mxu0
  %vm585 = vcmp.gt.f32.partialorder %v555, 0.0
  %vm586 = vcmp.gt.f32.partialorder %v558, 0.0
  %vm587 = vcmp.gt.f32.partialorder %v563, 0.0
  %vm588 = vcmp.gt.f32.partialorder %v566, 0.0
  %vm589 = vcmp.gt.f32.partialorder %v571, 0.0
  %vm590 = vcmp.gt.f32.partialorder %v574, 0.0
  %vm591 = vcmp.gt.f32.partialorder %v579, 0.0
  %vm592 = vcmp.gt.f32.partialorder %v582, 0.0
  %v593 = vmin.f32 %v555, 0.0
  %v594 = vmin.f32 %v558, 0.0
  %v595 = vmin.f32 %v563, 0.0
  %v596 = vmin.f32 %v566, 0.0
  %v597 = vmin.f32 %v571, 0.0
  %v598 = vmin.f32 %v574, 0.0
  %v599 = vmin.f32 %v579, 0.0
  %v600 = vmin.f32 %v582, 0.0
  %v601 = vmul.f32 %v593, 1.442695
  %v602 = vpow.pop %v601
  %v603 = vmul.f32 %v594, 1.442695
  %v604 = vpow.pop %v603
  %v605 = vmul.f32 %v595, 1.442695
  %v606 = vpow.pop %v605
  %v607 = vmul.f32 %v596, 1.442695
  %v608 = vpow.pop %v607
  %v609 = vmul.f32 %v597, 1.442695
  %v610 = vpow.pop %v609
  %v611 = vmul.f32 %v598, 1.442695
  %v612 = vpow.pop %v611
  %v613 = vmul.f32 %v599, 1.442695
  %v614 = vpow.pop %v613
  %v615 = vmul.f32 %v600, 1.442695
  %v616 = vpow.pop %v615
  %v617 = vsub.f32 %v602, 1.0
  %v618 = vsub.f32 %v604, 1.0
  %v619 = vsub.f32 %v606, 1.0
  %v620 = vsub.f32 %v608, 1.0
  %v621 = vsub.f32 %v610, 1.0
  %v622 = vsub.f32 %v612, 1.0
  %v623 = vsub.f32 %v614, 1.0
  %v624 = vsub.f32 %v616, 1.0
  %v625 = vsel %vm585, %v555, %v617
  %v626 = vsel %vm586, %v558, %v618
  %v627 = vsel %vm587, %v563, %v619
  %v628 = vsel %vm588, %v566, %v620
  %v629 = vsel %vm589, %v571, %v621
  %v630 = vsel %vm590, %v574, %v622
  %v631 = vsel %vm591, %v579, %v623
  %v632 = vsel %vm592, %v582, %v624
  %v633 = vpack.c.bf16 %v626, %v625
  %v634 = vpack.c.bf16 %v628, %v627
  %v635 = vpack.c.bf16 %v630, %v629
  %v636 = vpack.c.bf16 %v632, %v631
  %v637 = vlaneseq
  %v638 = vshrl.u32 %v637, 7
  %v639 = vsub.s32 4, %v638
  %v640 = vrot.slane %v35, %v639
  %v643 = vunpack.c.l.b16 %v33
  %v644 = vunpack.c.l.b16 %v34
  %v645 = vpack.c.b16 %v644, %v643
  %v648 = vsel %vm58, %v633, 0
  %v651 = vsel %vm58, %v634, 0
  %v654 = vsel %vm58, %v635, 0
  %v657 = vsel %vm58, %v636, 0
  %659 = vmatprep.subr.bf16.mxu0 0
  %660 = vmatpush1.bf16.msra.mxu0 0
  %661 = vmatprep.subr.bf16.mxu0 0
  %662 = vmatpush1.bf16.msra.mxu0 0
  %663 = vmatprep.subr.bf16.mxu0 0
  %664 = vmatpush1.bf16.msra.mxu0 0
  %665 = vmatprep.subr.bf16.mxu0 0
  %666 = vmatpush1.bf16.msra.mxu0 0
  %667 = vmatprep.subr.bf16.mxu0 0
  %668 = vmatpush1.bf16.msra.mxu0 0
  %669 = vmatprep.subr.bf16.mxu0 0
  %670 = vmatpush1.bf16.msra.mxu0 0
  %671 = vmatprep.subr.bf16.mxu0 0
  %672 = vmatpush1.bf16.msra.mxu0 0
  %673 = vmatprep.subr.bf16.mxu0 0
  %674 = vmatpush1.bf16.msra.mxu0 %v645
  %675 = vmatprep.subr.bf16.mxu0 0
  %676 = vmatpush2.bf16.msra.mxu0 0
  %677 = vmatprep.subr.bf16.mxu0 0
  %678 = vmatpush2.bf16.msra.mxu0 0
  %679 = vmatprep.subr.bf16.mxu0 0
  %680 = vmatpush2.bf16.msra.mxu0 0
  %681 = vmatprep.subr.bf16.mxu0 0
  %682 = vmatpush2.bf16.msra.mxu0 0
  %683 = vmatprep.subr.bf16.mxu0 0
  %684 = vmatpush2.bf16.msra.mxu0 0
  %685 = vmatprep.subr.bf16.mxu0 0
  %686 = vmatpush2.bf16.msra.mxu0 0
  %687 = vmatprep.subr.bf16.mxu0 0
  %688 = vmatpush2.bf16.msra.mxu0 0
  %689 = vmatprep.subr.bf16.mxu0 0
  %690 = vmatpush2.bf16.msra.mxu0 0
  %691 = vmatprep.mubr.bf16.mxu0 0
  %692 = vmatmul.mubr.bf16.gmra.mxu0 %v648
  %v693 = vpop.f32.mrf.mxu0
  %v694 = vadd.f32 %v640, %v693
  %v695 = vpop.f32.mrf.mxu0
  %v696 = vpop.f32.mrf.mxu0
  %v697 = vadd.f32 %v640, %v696
  %v698 = vpop.f32.mrf.mxu0
  %699 = vmatprep.mubr.bf16.mxu0 0
  %700 = vmatmul.mubr.bf16.gmra.mxu0 %v651
  %v701 = vpop.f32.mrf.mxu0
  %v702 = vadd.f32 %v640, %v701
  %v703 = vpop.f32.mrf.mxu0
  %v704 = vpop.f32.mrf.mxu0
  %v705 = vadd.f32 %v640, %v704
  %v706 = vpop.f32.mrf.mxu0
  %707 = vmatprep.mubr.bf16.mxu0 0
  %708 = vmatmul.mubr.bf16.gmra.mxu0 %v654
  %v709 = vpop.f32.mrf.mxu0
  %v710 = vadd.f32 %v640, %v709
  %v711 = vpop.f32.mrf.mxu0
  %v712 = vpop.f32.mrf.mxu0
  %v713 = vadd.f32 %v640, %v712
  %v714 = vpop.f32.mrf.mxu0
  %715 = vmatprep.mubr.bf16.mxu0 0
  %716 = vmatmul.mubr.bf16.gmra.mxu0 %v657
  %v717 = vpop.f32.mrf.mxu0
  %v718 = vadd.f32 %v640, %v717
  %v719 = vpop.f32.mrf.mxu0
  %v720 = vpop.f32.mrf.mxu0
  %v721 = vadd.f32 %v640, %v720
  %v722 = vpop.f32.mrf.mxu0
  %723 = vdwg.mxu0
  %v724 = vxor.u32 %v694, 2147483648
  %v725 = vxor.u32 %v697, 2147483648
  %v726 = vxor.u32 %v702, 2147483648
  %v727 = vxor.u32 %v705, 2147483648
  %v728 = vxor.u32 %v710, 2147483648
  %v729 = vxor.u32 %v713, 2147483648
  %v730 = vxor.u32 %v718, 2147483648
  %v731 = vxor.u32 %v721, 2147483648
  %v732 = vmul.f32 %v724, 1.442695
  %v733 = vpow.pop %v732
  %v734 = vmul.f32 %v725, 1.442695
  %v735 = vpow.pop %v734
  %v736 = vmul.f32 %v726, 1.442695
  %v737 = vpow.pop %v736
  %v738 = vmul.f32 %v727, 1.442695
  %v739 = vpow.pop %v738
  %v740 = vmul.f32 %v728, 1.442695
  %v741 = vpow.pop %v740
  %v742 = vmul.f32 %v729, 1.442695
  %v743 = vpow.pop %v742
  %v744 = vmul.f32 %v730, 1.442695
  %v745 = vpow.pop %v744
  %v746 = vmul.f32 %v731, 1.442695
  %v747 = vpow.pop %v746
  %v748 = vadd.f32 %v733, 1.0
  %v749 = vadd.f32 %v735, 1.0
  %v750 = vadd.f32 %v737, 1.0
  %v751 = vadd.f32 %v739, 1.0
  %v752 = vadd.f32 %v741, 1.0
  %v753 = vadd.f32 %v743, 1.0
  %v754 = vadd.f32 %v745, 1.0
  %v755 = vadd.f32 %v747, 1.0
  %v756 = vrcp.pop %v748
  %v757 = vmul.f32 1.0, %v756
  %v758 = vrcp.pop %v749
  %v759 = vmul.f32 1.0, %v758
  %v760 = vrcp.pop %v750
  %v761 = vmul.f32 1.0, %v760
  %v762 = vrcp.pop %v751
  %v763 = vmul.f32 1.0, %v762
  %v764 = vrcp.pop %v752
  %v765 = vmul.f32 1.0, %v764
  %v766 = vrcp.pop %v753
  %v767 = vmul.f32 1.0, %v766
  %v768 = vrcp.pop %v754
  %v769 = vmul.f32 1.0, %v768
  %v770 = vrcp.pop %v755
  %v771 = vmul.f32 1.0, %v770
  %780 = vrot.lane.b32.xlu0 %v757, 32
  %v781 = vpop.permute.xlu0 %780
  %782 = vrot.lane.b32.xlu0 %v759, 32
  %v783 = vpop.permute.xlu0 %782
  %784 = vrot.lane.b32.xlu0 %v761, 32
  %v785 = vpop.permute.xlu0 %784
  %786 = vrot.lane.b32.xlu0 %v763, 32
  %v787 = vpop.permute.xlu0 %786
  %788 = vrot.lane.b32.xlu0 %v765, 32
  %v789 = vpop.permute.xlu0 %788
  %790 = vrot.lane.b32.xlu0 %v767, 32
  %v791 = vpop.permute.xlu0 %790
  %792 = vrot.lane.b32.xlu0 %v769, 32
  %v793 = vpop.permute.xlu0 %792
  %794 = vrot.lane.b32.xlu0 %v771, 32
  %v795 = vpop.permute.xlu0 %794
  %v804 = vsel %vm204, %v176, %v781
  %v805 = vsel %vm204, %v177, %v783
  %v806 = vsel %vm204, %v178, %v785
  %v807 = vsel %vm204, %v179, %v787
  %v808 = vsel %vm204, %v180, %v789
  %v809 = vsel %vm204, %v181, %v791
  %v810 = vsel %vm204, %v182, %v793
  %v811 = vsel %vm204, %v183, %v795
  %v812 = vpack.c.bf16 %v805, %v804
  %v813 = vpack.c.bf16 %v807, %v806
  %v814 = vpack.c.bf16 %v809, %v808
  %v815 = vpack.c.bf16 %v811, %v810
  %v820 = vunpack.c.l.b16 %v812
  %v821 = vunpack.c.h.b16 %v812
  %v822 = vunpack.c.l.b16 %v813
  %v823 = vunpack.c.h.b16 %v813
  %v824 = vunpack.c.l.b16 %v814
  %v825 = vunpack.c.h.b16 %v814
  %v826 = vunpack.c.l.b16 %v815
  %v827 = vunpack.c.h.b16 %v815
  %v828 = vpack.c.b16 %v820, %v820
  %v829 = vpack.c.b16 %v821, %v821
  %v830 = vpack.c.b16 %v822, %v822
  %v831 = vpack.c.b16 %v823, %v823
  %v832 = vpack.c.b16 %v824, %v824
  %v833 = vpack.c.b16 %v825, %v825
  %v834 = vpack.c.b16 %v826, %v826
  %v835 = vpack.c.b16 %v827, %v827
  %vm844 = vcmask 273408
  %845 = vst.msk [vmem:[%s3] sm:$0xf] %vm844, %v828
  %846 = vst.msk [vmem:[%s3 + $0x4] sm:$0xf] %vm844, %v829
  %847 = vst.msk [vmem:[%s3 + $0x8] sm:$0xf] %vm844, %v830
  %848 = vst.msk [vmem:[%s3 + $0xc] sm:$0xf] %vm844, %v831
  %849 = vst.msk [vmem:[%s3 + $0x10] sm:$0xf] %vm844, %v832
  %850 = vst.msk [vmem:[%s3 + $0x14] sm:$0xf] %vm844, %v833
  %851 = vst.msk [vmem:[%s3 + $0x18] sm:$0xf] %vm844, %v834
  %852 = vst.msk [vmem:[%s3 + $0x1c] sm:$0xf] %vm844, %v835
  // Predicated region
  $region14: #{tpu_custom_call.1} parent=0 // pred_check
    _
  $region15: #{tpu_custom_call.1} parent=0 // pred_check_branch
    %854 = sbr.rel (0) target = $region17
  $region16: #{tpu_custom_call.1} parent=0 // pred_region
    _
  $region17: #{tpu_custom_call.1} parent=0 // pred_fallthru
    _
  // Predicated region
  $region18: #{tpu_custom_call.1} parent=0 // pred_check
    _
  $region19: #{tpu_custom_call.1} parent=0 // pred_check_branch
    %856 = sbr.rel (0) target = $region21
  $region20: #{tpu_custom_call.1} parent=0 // pred_region
    _
  $region21: #{tpu_custom_call.1} parent=0 // pred_fallthru
    _

</llo_original>
